<compile_context>
chip_gen: v7x
topology: tpu7x:2x2x1
jax: 0.10.0
libtpu: 0.0.40
codegen_flags: <defaults>
</compile_context>

<pallas_src>
import functools
import math

import jax
import jax.numpy as jnp
from jax.experimental import pallas as pl
from jax.experimental.pallas import tpu as pltpu

_LANES = 128
_MASK_FILL = -100.0  # sigmoid(-100) == 0 and log1p(exp(-100)) == 0 exactly (f32) via the tanh form.


def _num_tensorcores():
    """2 on v7x (megacore grid split); 1 on v5e/v6e where the extra axis is pure overhead."""
    try:
        kind = jax.devices()[0].device_kind.lower()
    except Exception:
        return 1
    return 2 if ("v7" in kind or "7x" in kind) else 1


def _vmem_capacity_bytes():
    try:
        cap = getattr(pltpu.get_tpu_info(), "vmem_capacity_bytes", None)
        if cap:
            return int(cap)
    except Exception:
        pass
    try:
        kind = jax.devices()[0].device_kind.lower()
        if "v7" in kind or "7x" in kind:
            return 64 << 20
    except Exception:
        pass
    return 128 << 20


def _plan(rows, spatial, x_bytes, y_bytes):
    """Pick (tile, fold_w, vmem_limit): largest fold-aligned column tile whose double-buffered inputs
    plus estimated full-tile f32 temporaries fit the chip's scoped-VMEM budget."""
    spatial_pad = pl.cdiv(spatial, _LANES) * _LANES
    vmem_cap = _vmem_capacity_bytes()
    vmem_limit = min((vmem_cap * 3) // 4, 96 << 20)          # v5e/v6e: 96 MiB, v7x: 48 MiB
    budget = max(vmem_limit - (6 << 20), 4 << 20)            # headroom for output buffer / misc scratch
    # Per (row, column) byte cost: 2 buffers per input + ~14 full-tile f32 temporaries.
    per_col = rows * (2 * (x_bytes + y_bytes) + 14 * 4)
    tile = budget // per_col
    tile = min(tile, 128 * 1024, spatial_pad)                # bound fold unroll / int32 index math
    tile = max((tile // _LANES) * _LANES, _LANES)
    fold_w = min(2048, tile)                                 # accumulator lane width (multiple of 128)
    tile = max((tile // fold_w) * fold_w, fold_w)
    return int(tile), int(fold_w), int(vmem_limit)


def _loss_stats_kernel(x_ref, y_ref, acc_ref, *, tiles_per_core, n_cols, tile, fold_w, need_mask):
    """Accumulates per-row dice statistics and BCE partial sums over spatial column tiles.

    acc_ref layout (lane-packed): [:, 0:F]=sum(p*y), [:, F:2F]=sum(p), [:, 2F:3F]=sum(y), [:, 3F:4F]=sum(bce).
    """
    c = pl.program_id(0)                 # core-split axis ("parallel")
    k = pl.program_id(1)                 # spatial tile axis ("arbitrary", reduction)
    g = c * tiles_per_core + k           # global (unclamped) column-tile index
    rows = x_ref.shape[0]
    n_groups = tile // fold_w

    @pl.when(k == 0)
    def _init():
        acc_ref[...] = jnp.zeros_like(acc_ref)

    def accumulate(masked):
        x = x_ref[...].astype(jnp.float32)
        y = y_ref[...].astype(jnp.float32)
        if masked:
            col = g * tile + jax.lax.broadcasted_iota(jnp.int32, (rows, tile), 1)
            valid = col < n_cols
            # Fill -100 => s = 1, p = 0, bce = 0 exactly, so masked columns add exactly zero everywhere.
            x = jnp.where(valid, x, _MASK_FILL)
            y = jnp.where(valid, y, 0.0)

        ax = jnp.abs(x)
        s = 0.5 * (1.0 + jnp.tanh(0.5 * ax))            # sigmoid(|x|)              (EUP: tanh)
        p = jnp.where(x >= 0.0, s, 1.0 - s)             # sigmoid(x)
        b = jnp.maximum(x, 0.0) - x * y - jnp.log(s)    # stable BCE-with-logits    (EUP: log); s >= 0.5

        def fold(v):
            # (rows, tile) -> (rows, fold_w) via static, 128-aligned slice adds (pure VALU, no relayout).
            out = v[:, :fold_w]
            for i in range(1, n_groups):
                out = out + v[:, i * fold_w:(i + 1) * fold_w]
            return out

        acc_ref[:, 0 * fold_w:1 * fold_w] += fold(p * y)   # intersection
        acc_ref[:, 1 * fold_w:2 * fold_w] += fold(p)       # sum(pred)
        acc_ref[:, 2 * fold_w:3 * fold_w] += fold(y)       # sum(gt)
        acc_ref[:, 3 * fold_w:4 * fold_w] += fold(b)       # bce sum

    if need_mask:
        # Only the genuine partial tail tile and padded duplicate iterations pay the masking cost.
        is_tail = (g + 1) * tile > n_cols

        @pl.when(jnp.logical_not(is_tail))
        def _fast():
            accumulate(False)

        @pl.when(is_tail)
        def _tail():
            accumulate(True)
    else:
        accumulate(False)


@jax.jit
def dc_and_bce_loss(predicted, target):
    """predicted, target: (B, C, D, H, W) arrays (target in {0,1}). Returns the scalar loss."""
    assert predicted.shape == target.shape
    B, C = predicted.shape[0], predicted.shape[1]
    rows = B * C
    spatial = math.prod(predicted.shape[2:])
    assert spatial < 2 ** 31, "int32 column indices would overflow"

    # Free reshapes only — no pad, no HBM-side dtype copy; per-tile f32 cast happens in VMEM.
    x = predicted.reshape(rows, spatial)
    y = target.reshape(rows, spatial)

    tile, fold_w, vmem_limit = _plan(rows, spatial, x.dtype.itemsize, y.dtype.itemsize)

    n_tiles = pl.cdiv(spatial, tile)
    n_cores = min(_num_tensorcores(), n_tiles)
    tiles_per_core = pl.cdiv(n_tiles, n_cores)
    need_mask = (tiles_per_core * n_cores * tile) != spatial

    kernel = functools.partial(
        _loss_stats_kernel,
        tiles_per_core=tiles_per_core, n_cols=spatial, tile=tile, fold_w=fold_w, need_mask=need_mask)

    def in_map(c, k):
        # Clamp so the DMA window always lies in-bounds; clamped duplicates are zeroed by the tail mask.
        return (0, jnp.minimum(c * tiles_per_core + k, n_tiles - 1))

    acc = pl.pallas_call(
        kernel,
        out_shape=jax.ShapeDtypeStruct((n_cores, rows, 4 * fold_w), jnp.float32),
        grid_spec=pltpu.PrefetchScalarGridSpec(
            num_scalar_prefetch=0,
            grid=(n_cores, tiles_per_core),
            in_specs=[
                pl.BlockSpec((rows, tile), in_map),
                pl.BlockSpec((rows, tile), in_map),
            ],
            out_specs=pl.BlockSpec((None, rows, 4 * fold_w), lambda c, k: (c, 0, 0)),
        ),
        compiler_params=pltpu.CompilerParams(
            dimension_semantics=("parallel", "arbitrary"),
            vmem_limit_bytes=vmem_limit,
        ),
    )(x, y)

    # Tiny plain-JAX epilogue: combine per-core slabs, reduce lanes, dice + means.
    acc = jnp.sum(acc, axis=0)                                   # (rows, 4*fold_w)
    inter = jnp.sum(acc[:, 0 * fold_w:1 * fold_w], axis=-1)      # (rows,)
    spred = jnp.sum(acc[:, 1 * fold_w:2 * fold_w], axis=-1)
    sgt = jnp.sum(acc[:, 2 * fold_w:3 * fold_w], axis=-1)
    bce_total = jnp.sum(acc[:, 3 * fold_w:4 * fold_w])

    smooth = 1.0
    dice = (2.0 * inter + smooth) / jnp.maximum(spred + sgt + smooth, 1e-8)
    dc_loss = -jnp.mean(dice)
    ce_loss = bce_total / float(rows * spatial)
    return ce_loss + dc_loss                                     # weight_ce * ce + weight_dice * dc (both 1)


def _reference_loss(predicted, target):
    x = predicted.astype(jnp.float32)
    y = target.astype(jnp.float32)
    p = jax.nn.sigmoid(x)
    axes = tuple(range(2, x.ndim))
    inter = jnp.sum(p * y, axis=axes)
    spred = jnp.sum(p, axis=axes)
    sgt = jnp.sum(y, axis=axes)
    dice = (2.0 * inter + 1.0) / jnp.maximum(spred + sgt + 1.0, 1e-8)
    dc_loss = -jnp.mean(dice)
    bce = jnp.maximum(x, 0.0) - x * y + jnp.log1p(jnp.exp(-jnp.abs(x)))
    ce_loss = jnp.mean(bce)
    return ce_loss + dc_loss


if __name__ == "__main__":
    key = jax.random.PRNGKey(0)
    k1, k2 = jax.random.split(key)

    # Small 3D segmentation shapes: (B, C, D, H, W)
    B, C, D, H, W = 2, 4, 8, 16, 16
    predicted = jax.random.normal(k1, (B, C, D, H, W), dtype=jnp.float32)
    target = (jax.random.uniform(k2, (B, C, D, H, W)) > 0.5).astype(jnp.float32)

    loss = dc_and_bce_loss(predicted, target)
    loss = jax.block_until_ready(loss)

    ref = jax.block_until_ready(_reference_loss(predicted, target))
    assert jnp.allclose(loss, ref, atol=2e-3, rtol=2e-3), (loss, ref)

    print("KERNEL_OK")
</pallas_src>

<mosaic_0001>
module attributes {stable_mosaic.version = 11 : i64} {
  func.func @_loss_stats_kernel(%arg0: i32, %arg1: i32, %arg2: memref<8x2048xf32, #tpu.memory_space<vmem>>, %arg3: memref<8x2048xf32, #tpu.memory_space<vmem>>, %arg4: memref<1x8x8192xf32, #tpu.memory_space<vmem>>) attributes {dimension_semantics = [#tpu.dimension_semantics<parallel>, #tpu.dimension_semantics<arbitrary>], iteration_bounds = array<i64: 1, 1>, scalar_prefetch = 0 : i64, scratch_operands = 0 : i64, tpu.core_type = #tpu.core_type<tc>, window_params = [{transform_indices = @transform_0, window_bounds = array<i64: 8, 2048>}, {transform_indices = @transform_1, window_bounds = array<i64: 8, 2048>}, {transform_indices = @transform_2, window_bounds = array<i64: 1, 8, 8192>}]} {
    %c0_i32 = arith.constant 0 : i32
    %0 = arith.cmpi eq, %arg1, %c0_i32 : i32
    %1 = arith.extui %0 : i1 to i32
    %c0_i32_0 = arith.constant 0 : i32
    %2 = arith.cmpi ne, %1, %c0_i32_0 : i32
    scf.if %2 {
      %cst_30 = arith.constant 0.000000e+00 : f32
      %49 = vector.broadcast %cst_30 : f32 to vector<8x8192xf32>
      %c0_31 = arith.constant 0 : index
      %c0_32 = arith.constant 0 : index
      %c0_33 = arith.constant 0 : index
      %50 = vector.load %arg4[%c0_31, %c0_32, %c0_33] : memref<1x8x8192xf32, #tpu.memory_space<vmem>>, vector<1x8x8192xf32>
      %51 = vector.shape_cast %50 : vector<1x8x8192xf32> to vector<8x8192xf32>
      %52 = vector.shape_cast %49 : vector<8x8192xf32> to vector<1x8x8192xf32>
      tpu.vector_store %arg4[%c0_31, %c0_32, %c0_33], %52 {strides = array<i32>} : memref<1x8x8192xf32, #tpu.memory_space<vmem>>, vector<1x8x8192xf32>,
    } else {
    }
    %c0 = arith.constant 0 : index
    %c0_1 = arith.constant 0 : index
    %3 = vector.load %arg2[%c0, %c0_1] : memref<8x2048xf32, #tpu.memory_space<vmem>>, vector<8x2048xf32>
    %c0_2 = arith.constant 0 : index
    %c0_3 = arith.constant 0 : index
    %4 = vector.load %arg3[%c0_2, %c0_3] : memref<8x2048xf32, #tpu.memory_space<vmem>>, vector<8x2048xf32>
    %5 = math.absf %3 : vector<8x2048xf32>
    %cst = arith.constant 5.000000e-01 : f32
    %6 = vector.broadcast %cst : f32 to vector<8x2048xf32>
    %7 = arith.mulf %6, %5 : vector<8x2048xf32>
    %8 = math.tanh %7 : vector<8x2048xf32>
    %cst_4 = arith.constant 1.000000e+00 : f32
    %9 = vector.broadcast %cst_4 : f32 to vector<8x2048xf32>
    %10 = arith.addf %9, %8 : vector<8x2048xf32>
    %cst_5 = arith.constant 5.000000e-01 : f32
    %11 = vector.broadcast %cst_5 : f32 to vector<8x2048xf32>
    %12 = arith.mulf %11, %10 : vector<8x2048xf32>
    %cst_6 = arith.constant 0.000000e+00 : f32
    %13 = vector.broadcast %cst_6 : f32 to vector<8x2048xf32>
    %14 = arith.cmpf oge, %3, %13 : vector<8x2048xf32>
    %cst_7 = arith.constant 1.000000e+00 : f32
    %15 = vector.broadcast %cst_7 : f32 to vector<8x2048xf32>
    %16 = arith.subf %15, %12 : vector<8x2048xf32>
    %17 = arith.select %14, %12, %16 : vector<8x2048xi1>, vector<8x2048xf32>
    %cst_8 = arith.constant 0.000000e+00 : f32
    %18 = vector.broadcast %cst_8 : f32 to vector<8x2048xf32>
    %19 = arith.maximumf %3, %18 : vector<8x2048xf32>
    %20 = arith.mulf %3, %4 : vector<8x2048xf32>
    %21 = arith.subf %19, %20 : vector<8x2048xf32>
    %22 = math.log %12 : vector<8x2048xf32>
    %23 = arith.subf %21, %22 : vector<8x2048xf32>
    %c0_9 = arith.constant 0 : index
    %c0_10 = arith.constant 0 : index
    %c0_11 = arith.constant 0 : index
    %24 = vector.load %arg4[%c0_9, %c0_10, %c0_11] : memref<1x8x8192xf32, #tpu.memory_space<vmem>>, vector<1x8x2048xf32>
    %25 = vector.shape_cast %24 : vector<1x8x2048xf32> to vector<8x2048xf32>
    %26 = arith.mulf %17, %4 : vector<8x2048xf32>
    %27 = arith.addf %25, %26 : vector<8x2048xf32>
    %c0_12 = arith.constant 0 : index
    %c0_13 = arith.constant 0 : index
    %c0_14 = arith.constant 0 : index
    %28 = vector.load %arg4[%c0_12, %c0_13, %c0_14] : memref<1x8x8192xf32, #tpu.memory_space<vmem>>, vector<1x8x2048xf32>
    %29 = vector.shape_cast %28 : vector<1x8x2048xf32> to vector<8x2048xf32>
    %30 = vector.shape_cast %27 : vector<8x2048xf32> to vector<1x8x2048xf32>
    tpu.vector_store %arg4[%c0_12, %c0_13, %c0_14], %30 {strides = array<i32>} : memref<1x8x8192xf32, #tpu.memory_space<vmem>>, vector<1x8x2048xf32>,
    %c0_15 = arith.constant 0 : index
    %c0_16 = arith.constant 0 : index
    %c2048 = arith.constant 2048 : index
    %31 = vector.load %arg4[%c0_15, %c0_16, %c2048] : memref<1x8x8192xf32, #tpu.memory_space<vmem>>, vector<1x8x2048xf32>
    %32 = vector.shape_cast %31 : vector<1x8x2048xf32> to vector<8x2048xf32>
    %33 = arith.addf %32, %17 : vector<8x2048xf32>
    %c0_17 = arith.constant 0 : index
    %c0_18 = arith.constant 0 : index
    %c2048_19 = arith.constant 2048 : index
    %34 = vector.load %arg4[%c0_17, %c0_18, %c2048_19] : memref<1x8x8192xf32, #tpu.memory_space<vmem>>, vector<1x8x2048xf32>
    %35 = vector.shape_cast %34 : vector<1x8x2048xf32> to vector<8x2048xf32>
    %36 = vector.shape_cast %33 : vector<8x2048xf32> to vector<1x8x2048xf32>
    tpu.vector_store %arg4[%c0_17, %c0_18, %c2048_19], %36 {strides = array<i32>} : memref<1x8x8192xf32, #tpu.memory_space<vmem>>, vector<1x8x2048xf32>,
    %c0_20 = arith.constant 0 : index
    %c0_21 = arith.constant 0 : index
    %c4096 = arith.constant 4096 : index
    %37 = vector.load %arg4[%c0_20, %c0_21, %c4096] : memref<1x8x8192xf32, #tpu.memory_space<vmem>>, vector<1x8x2048xf32>
    %38 = vector.shape_cast %37 : vector<1x8x2048xf32> to vector<8x2048xf32>
    %39 = arith.addf %38, %4 : vector<8x2048xf32>
    %c0_22 = arith.constant 0 : index
    %c0_23 = arith.constant 0 : index
    %c4096_24 = arith.constant 4096 : index
    %40 = vector.load %arg4[%c0_22, %c0_23, %c4096_24] : memref<1x8x8192xf32, #tpu.memory_space<vmem>>, vector<1x8x2048xf32>
    %41 = vector.shape_cast %40 : vector<1x8x2048xf32> to vector<8x2048xf32>
    %42 = vector.shape_cast %39 : vector<8x2048xf32> to vector<1x8x2048xf32>
    tpu.vector_store %arg4[%c0_22, %c0_23, %c4096_24], %42 {strides = array<i32>} : memref<1x8x8192xf32, #tpu.memory_space<vmem>>, vector<1x8x2048xf32>,
    %c0_25 = arith.constant 0 : index
    %c0_26 = arith.constant 0 : index
    %c6144 = arith.constant 6144 : index
    %43 = vector.load %arg4[%c0_25, %c0_26, %c6144] : memref<1x8x8192xf32, #tpu.memory_space<vmem>>, vector<1x8x2048xf32>
    %44 = vector.shape_cast %43 : vector<1x8x2048xf32> to vector<8x2048xf32>
    %45 = arith.addf %44, %23 : vector<8x2048xf32>
    %c0_27 = arith.constant 0 : index
    %c0_28 = arith.constant 0 : index
    %c6144_29 = arith.constant 6144 : index
    %46 = vector.load %arg4[%c0_27, %c0_28, %c6144_29] : memref<1x8x8192xf32, #tpu.memory_space<vmem>>, vector<1x8x2048xf32>
    %47 = vector.shape_cast %46 : vector<1x8x2048xf32> to vector<8x2048xf32>
    %48 = vector.shape_cast %45 : vector<8x2048xf32> to vector<1x8x2048xf32>
    tpu.vector_store %arg4[%c0_27, %c0_28, %c6144_29], %48 {strides = array<i32>} : memref<1x8x8192xf32, #tpu.memory_space<vmem>>, vector<1x8x2048xf32>,
    return
  }
  func.func @transform_0(%arg0: i32, %arg1: i32) -> (i32, i32) {
    %c1_i32 = arith.constant 1 : i32
    %0 = arith.muli %arg0, %c1_i32 : i32
    %1 = arith.addi %0, %arg1 : i32
    %c0_i32 = arith.constant 0 : i32
    %2 = arith.minsi %1, %c0_i32 : i32
    %c0_i32_0 = arith.constant 0 : i32
    %c0_i32_1 = arith.constant 0 : i32
    return %c0_i32_0, %2 : i32, i32
  }
  func.func @transform_1(%arg0: i32, %arg1: i32) -> (i32, i32) {
    %c1_i32 = arith.constant 1 : i32
    %0 = arith.muli %arg0, %c1_i32 : i32
    %1 = arith.addi %0, %arg1 : i32
    %c0_i32 = arith.constant 0 : i32
    %2 = arith.minsi %1, %c0_i32 : i32
    %c0_i32_0 = arith.constant 0 : i32
    %c0_i32_1 = arith.constant 0 : i32
    return %c0_i32_0, %2 : i32, i32
  }
  func.func @transform_2(%arg0: i32, %arg1: i32) -> (i32, i32, i32) {
    %c0_i32 = arith.constant 0 : i32
    %c0_i32_0 = arith.constant 0 : i32
    %c0_i32_1 = arith.constant 0 : i32
    return %arg0, %c0_i32, %c0_i32_0 : i32, i32, i32
  }
}

</mosaic_0001>

<llo_original>
// kernel: dc_and_bce_loss.1
$region0: #{dc_and_bce_loss.1}
  #allocation0 [shape = 'u32[]', space=smem, size = 0x4, offset = 0x4, fixed_abs, tag = 'smem constant byte address 0x4 - core index']
  #allocation1 [shape = 'u32[144,128]{1,0:T(1,128)}', space=vmem, size = 0x12000, scoped, tag = 'internal scratch']
  %s0 = inlined_call_operand.hbm [shape: f32[8,2048], index: 0, kind: input, shape index: {}]
  %s1 = inlined_call_operand.hbm [shape: f32[8,2048], index: 1, kind: input, shape index: {}]
  %s2 = inlined_call_operand.hbm [shape: f32[1,8,8192], index: 2, kind: output, shape index: {}]
  %s3 = sld [smem:[#allocation0]]
  $region30: #{dc_and_bce_loss.1} parent=0
    _
  %s5 = ssub.s32 1, %s3
  %s6 = scalar_select 0, %s5, %s3
  $region1: #{dc_and_bce_loss.1} parent=0
    #allocation2 [shape = 'u8[65536]{0}', space=vmem, size = 0x10000, scoped, tag = 'input window, operand 0, single buffered']
    #allocation3 [shape = 's32[1]{0}', space=sflag, size = 0x4, scoped, tag = 'scoped memory for dc_and_bce_loss.1']
    #allocation4 [shape = 's32[1]{0}', space=sflag, size = 0x4, scoped, tag = 'scoped memory for dc_and_bce_loss.1']
    #allocation5 [shape = 'u8[65536]{0}', space=vmem, size = 0x10000, scoped, tag = 'input window, operand 1, single buffered']
    #allocation6 [shape = 's32[1]{0}', space=sflag, size = 0x4, scoped, tag = 'scoped memory for dc_and_bce_loss.1']
    #allocation7 [shape = 'u8[262144]{0}', space=vmem, size = 0x40000, scoped, tag = 'output window, operand 0, single buffered']
    %7 = vsyncpa [#allocation3], 0
    %8 = vsyncpa [#allocation6], 0
    %9 = vsyncpa [#allocation4], 0
    // Predicated region
    $region2: #{dc_and_bce_loss.1} parent=1 // pred_check
      _
    $region3: #{dc_and_bce_loss.1} parent=1 // pred_check_branch
      %11 = sbr.rel (0) target = $region5
    $region4: #{dc_and_bce_loss.1} parent=1 // pred_region
      %s12 = sadd.s32 0, 0
      %p13 = scmp.lt.s32.totalorder %s12, 0
      %s14 = scalar_select %p13, %s12, 0
      %s15 = smul.u32 16, %s14
      %s17 = ssub.s32 2048, 2048
      %18 = vsyncadd [#allocation3], %s17
      %s19 = smul.addr %s15, 128
      %s20 = scalar_lea.hbm %s0, %s19
      %s22 = sshll.u32 [#allocation2], 4
      %s23 = int_to_ptr.vmem [resolvable:$true] %s22
      %25 = dma.hbm_to_vmem [thread:$0]  %s20, 2048, %s23, [#allocation3]
    $region5: #{dc_and_bce_loss.1} parent=1 // pred_fallthru
      _
    // Predicated region
    $region6: #{dc_and_bce_loss.1} parent=1 // pred_check
      _
    $region7: #{dc_and_bce_loss.1} parent=1 // pred_check_branch
      %27 = sbr.rel (0) target = $region9
    $region8: #{dc_and_bce_loss.1} parent=1 // pred_region
      %s28 = sadd.s32 0, 0
      %p29 = scmp.lt.s32.totalorder %s28, 0
      %s30 = scalar_select %p29, %s28, 0
      %s31 = smul.u32 16, %s30
      %s33 = ssub.s32 2048, 2048
      %34 = vsyncadd [#allocation6], %s33
      %s35 = smul.addr %s31, 128
      %s36 = scalar_lea.hbm %s1, %s35
      %s38 = sshll.u32 [#allocation5], 4
      %s39 = int_to_ptr.vmem [resolvable:$true] %s38
      %41 = dma.hbm_to_vmem [thread:$0]  %s36, 2048, %s39, [#allocation6]
    $region9: #{dc_and_bce_loss.1} parent=1 // pred_fallthru
      _
    // Predicated region
    $region10: #{dc_and_bce_loss.1} parent=1 // pred_check
      _
    $region11: #{dc_and_bce_loss.1} parent=1 // pred_check_branch
      %43 = sbr.rel (0) target = $region13
    $region12: #{dc_and_bce_loss.1} parent=1 // pred_region
      %44 = dma.done [#allocation3], 2048
    $region13: #{dc_and_bce_loss.1} parent=1 // pred_fallthru
      _
    // Predicated region
    $region14: #{dc_and_bce_loss.1} parent=1 // pred_check
      _
    $region15: #{dc_and_bce_loss.1} parent=1 // pred_check_branch
      %46 = sbr.rel (0) target = $region17
    $region16: #{dc_and_bce_loss.1} parent=1 // pred_region
      %47 = dma.done [#allocation6], 2048
    $region17: #{dc_and_bce_loss.1} parent=1 // pred_fallthru
      _
    %s48 = sadd.s32 0, 0
    %p49 = scmp.lt.s32.totalorder %s48, 0
    %s50 = scalar_select %p49, %s48, 0
    %s51 = smul.u32 16, %s50
    %s52 = sadd.s32 0, 0
    %p53 = scmp.lt.s32.totalorder %s52, 0
    %s54 = scalar_select %p53, %s52, 0
    %s55 = smul.u32 16, %s54
    %p56 = scmp.eq.s32.totalorder 0, 0
    // Predicated region
    $region18: #{dc_and_bce_loss.1} parent=1 // pred_check
      %p57 = pneg %p56
    $region19: #{dc_and_bce_loss.1} parent=1 // pred_check_branch
      %59 = sbr.rel (%p57) target = $region21
    $region20: #{dc_and_bce_loss.1} parent=1 // pred_region
      %60 = vst [vmem:[#allocation7] sm:$0xff] 0.0
      %61 = vst [vmem:[#allocation7 + $0x8] sm:$0xff] 0.0
      %62 = vst [vmem:[#allocation7 + $0x10] sm:$0xff] 0.0
      %63 = vst [vmem:[#allocation7 + $0x18] sm:$0xff] 0.0
      %64 = vst [vmem:[#allocation7 + $0x20] sm:$0xff] 0.0
      %65 = vst [vmem:[#allocation7 + $0x28] sm:$0xff] 0.0
      %66 = vst [vmem:[#allocation7 + $0x30] sm:$0xff] 0.0
      %67 = vst [vmem:[#allocation7 + $0x38] sm:$0xff] 0.0
      %68 = vst [vmem:[#allocation7 + $0x40] sm:$0xff] 0.0
      %69 = vst [vmem:[#allocation7 + $0x48] sm:$0xff] 0.0
      %70 = vst [vmem:[#allocation7 + $0x50] sm:$0xff] 0.0
      %71 = vst [vmem:[#allocation7 + $0x58] sm:$0xff] 0.0
      %72 = vst [vmem:[#allocation7 + $0x60] sm:$0xff] 0.0
      %73 = vst [vmem:[#allocation7 + $0x68] sm:$0xff] 0.0
      %74 = vst [vmem:[#allocation7 + $0x70] sm:$0xff] 0.0
      %75 = vst [vmem:[#allocation7 + $0x78] sm:$0xff] 0.0
      %76 = vst [vmem:[#allocation7 + $0x80] sm:$0xff] 0.0
      %77 = vst [vmem:[#allocation7 + $0x88] sm:$0xff] 0.0
      %78 = vst [vmem:[#allocation7 + $0x90] sm:$0xff] 0.0
      %79 = vst [vmem:[#allocation7 + $0x98] sm:$0xff] 0.0
      %80 = vst [vmem:[#allocation7 + $0xa0] sm:$0xff] 0.0
      %81 = vst [vmem:[#allocation7 + $0xa8] sm:$0xff] 0.0
      %82 = vst [vmem:[#allocation7 + $0xb0] sm:$0xff] 0.0
      %83 = vst [vmem:[#allocation7 + $0xb8] sm:$0xff] 0.0
      %84 = vst [vmem:[#allocation7 + $0xc0] sm:$0xff] 0.0
      %85 = vst [vmem:[#allocation7 + $0xc8] sm:$0xff] 0.0
      %86 = vst [vmem:[#allocation7 + $0xd0] sm:$0xff] 0.0
      %87 = vst [vmem:[#allocation7 + $0xd8] sm:$0xff] 0.0
      %88 = vst [vmem:[#allocation7 + $0xe0] sm:$0xff] 0.0
      %89 = vst [vmem:[#allocation7 + $0xe8] sm:$0xff] 0.0
      %90 = vst [vmem:[#allocation7 + $0xf0] sm:$0xff] 0.0
      %91 = vst [vmem:[#allocation7 + $0xf8] sm:$0xff] 0.0
      %92 = vst [vmem:[#allocation7 + $0x100] sm:$0xff] 0.0
      %93 = vst [vmem:[#allocation7 + $0x108] sm:$0xff] 0.0
      %94 = vst [vmem:[#allocation7 + $0x110] sm:$0xff] 0.0
      %95 = vst [vmem:[#allocation7 + $0x118] sm:$0xff] 0.0
      %96 = vst [vmem:[#allocation7 + $0x120] sm:$0xff] 0.0
      %97 = vst [vmem:[#allocation7 + $0x128] sm:$0xff] 0.0
      %98 = vst [vmem:[#allocation7 + $0x130] sm:$0xff] 0.0
      %99 = vst [vmem:[#allocation7 + $0x138] sm:$0xff] 0.0
      %100 = vst [vmem:[#allocation7 + $0x140] sm:$0xff] 0.0
      %101 = vst [vmem:[#allocation7 + $0x148] sm:$0xff] 0.0
      %102 = vst [vmem:[#allocation7 + $0x150] sm:$0xff] 0.0
      %103 = vst [vmem:[#allocation7 + $0x158] sm:$0xff] 0.0
      %104 = vst [vmem:[#allocation7 + $0x160] sm:$0xff] 0.0
      %105 = vst [vmem:[#allocation7 + $0x168] sm:$0xff] 0.0
      %106 = vst [vmem:[#allocation7 + $0x170] sm:$0xff] 0.0
      %107 = vst [vmem:[#allocation7 + $0x178] sm:$0xff] 0.0
      %108 = vst [vmem:[#allocation7 + $0x180] sm:$0xff] 0.0
      %109 = vst [vmem:[#allocation7 + $0x188] sm:$0xff] 0.0
      %110 = vst [vmem:[#allocation7 + $0x190] sm:$0xff] 0.0
      %111 = vst [vmem:[#allocation7 + $0x198] sm:$0xff] 0.0
      %112 = vst [vmem:[#allocation7 + $0x1a0] sm:$0xff] 0.0
      %113 = vst [vmem:[#allocation7 + $0x1a8] sm:$0xff] 0.0
      %114 = vst [vmem:[#allocation7 + $0x1b0] sm:$0xff] 0.0
      %115 = vst [vmem:[#allocation7 + $0x1b8] sm:$0xff] 0.0
      %116 = vst [vmem:[#allocation7 + $0x1c0] sm:$0xff] 0.0
      %117 = vst [vmem:[#allocation7 + $0x1c8] sm:$0xff] 0.0
      %118 = vst [vmem:[#allocation7 + $0x1d0] sm:$0xff] 0.0
      %119 = vst [vmem:[#allocation7 + $0x1d8] sm:$0xff] 0.0
      %120 = vst [vmem:[#allocation7 + $0x1e0] sm:$0xff] 0.0
      %121 = vst [vmem:[#allocation7 + $0x1e8] sm:$0xff] 0.0
      %122 = vst [vmem:[#allocation7 + $0x1f0] sm:$0xff] 0.0
      %123 = vst [vmem:[#allocation7 + $0x1f8] sm:$0xff] 0.0
    $region21: #{dc_and_bce_loss.1} parent=1 // pred_fallthru
      _
    %v124 = vld [vmem:[#allocation2] sm:$0xff]
    %v125 = vld [vmem:[#allocation2 + $0x8] sm:$0xff]
    %v126 = vld [vmem:[#allocation2 + $0x10] sm:$0xff]
    %v127 = vld [vmem:[#allocation2 + $0x18] sm:$0xff]
    %v128 = vld [vmem:[#allocation2 + $0x20] sm:$0xff]
    %v129 = vld [vmem:[#allocation2 + $0x28] sm:$0xff]
    %v130 = vld [vmem:[#allocation2 + $0x30] sm:$0xff]
    %v131 = vld [vmem:[#allocation2 + $0x38] sm:$0xff]
    %v132 = vld [vmem:[#allocation2 + $0x40] sm:$0xff]
    %v133 = vld [vmem:[#allocation2 + $0x48] sm:$0xff]
    %v134 = vld [vmem:[#allocation2 + $0x50] sm:$0xff]
    %v135 = vld [vmem:[#allocation2 + $0x58] sm:$0xff]
    %v136 = vld [vmem:[#allocation2 + $0x60] sm:$0xff]
    %v137 = vld [vmem:[#allocation2 + $0x68] sm:$0xff]
    %v138 = vld [vmem:[#allocation2 + $0x70] sm:$0xff]
    %v139 = vld [vmem:[#allocation2 + $0x78] sm:$0xff]
    %v140 = vld [vmem:[#allocation5] sm:$0xff]
    %v141 = vld [vmem:[#allocation5 + $0x8] sm:$0xff]
    %v142 = vld [vmem:[#allocation5 + $0x10] sm:$0xff]
    %v143 = vld [vmem:[#allocation5 + $0x18] sm:$0xff]
    %v144 = vld [vmem:[#allocation5 + $0x20] sm:$0xff]
    %v145 = vld [vmem:[#allocation5 + $0x28] sm:$0xff]
    %v146 = vld [vmem:[#allocation5 + $0x30] sm:$0xff]
    %v147 = vld [vmem:[#allocation5 + $0x38] sm:$0xff]
    %v148 = vld [vmem:[#allocation5 + $0x40] sm:$0xff]
    %v149 = vld [vmem:[#allocation5 + $0x48] sm:$0xff]
    %v150 = vld [vmem:[#allocation5 + $0x50] sm:$0xff]
    %v151 = vld [vmem:[#allocation5 + $0x58] sm:$0xff]
    %v152 = vld [vmem:[#allocation5 + $0x60] sm:$0xff]
    %v153 = vld [vmem:[#allocation5 + $0x68] sm:$0xff]
    %v154 = vld [vmem:[#allocation5 + $0x70] sm:$0xff]
    %v155 = vld [vmem:[#allocation5 + $0x78] sm:$0xff]
    %v156 = vand.u32 2147483647, %v124
    %v157 = vand.u32 2147483647, %v125
    %v158 = vand.u32 2147483647, %v126
    %v159 = vand.u32 2147483647, %v127
    %v160 = vand.u32 2147483647, %v128
    %v161 = vand.u32 2147483647, %v129
    %v162 = vand.u32 2147483647, %v130
    %v163 = vand.u32 2147483647, %v131
    %v164 = vand.u32 2147483647, %v132
    %v165 = vand.u32 2147483647, %v133
    %v166 = vand.u32 2147483647, %v134
    %v167 = vand.u32 2147483647, %v135
    %v168 = vand.u32 2147483647, %v136
    %v169 = vand.u32 2147483647, %v137
    %v170 = vand.u32 2147483647, %v138
    %v171 = vand.u32 2147483647, %v139
    %v172 = vmul.f32 %v156, 0.5
    %v173 = vmul.f32 %v157, 0.5
    %v174 = vmul.f32 %v158, 0.5
    %v175 = vmul.f32 %v159, 0.5
    %v176 = vmul.f32 %v160, 0.5
    %v177 = vmul.f32 %v161, 0.5
    %v178 = vmul.f32 %v162, 0.5
    %v179 = vmul.f32 %v163, 0.5
    %v180 = vmul.f32 %v164, 0.5
    %v181 = vmul.f32 %v165, 0.5
    %v182 = vmul.f32 %v166, 0.5
    %v183 = vmul.f32 %v167, 0.5
    %v184 = vmul.f32 %v168, 0.5
    %v185 = vmul.f32 %v169, 0.5
    %v186 = vmul.f32 %v170, 0.5
    %v187 = vmul.f32 %v171, 0.5
    %v188 = vtanh.pop %v172
    %v189 = vtanh.pop %v173
    %v190 = vtanh.pop %v174
    %v191 = vtanh.pop %v175
    %v192 = vtanh.pop %v176
    %v193 = vtanh.pop %v177
    %v194 = vtanh.pop %v178
    %v195 = vtanh.pop %v179
    %v196 = vtanh.pop %v180
    %v197 = vtanh.pop %v181
    %v198 = vtanh.pop %v182
    %v199 = vtanh.pop %v183
    %v200 = vtanh.pop %v184
    %v201 = vtanh.pop %v185
    %v202 = vtanh.pop %v186
    %v203 = vtanh.pop %v187
    %v204 = vadd.f32 %v188, 1.0
    %v205 = vadd.f32 %v189, 1.0
    %v206 = vadd.f32 %v190, 1.0
    %v207 = vadd.f32 %v191, 1.0
    %v208 = vadd.f32 %v192, 1.0
    %v209 = vadd.f32 %v193, 1.0
    %v210 = vadd.f32 %v194, 1.0
    %v211 = vadd.f32 %v195, 1.0
    %v212 = vadd.f32 %v196, 1.0
    %v213 = vadd.f32 %v197, 1.0
    %v214 = vadd.f32 %v198, 1.0
    %v215 = vadd.f32 %v199, 1.0
    %v216 = vadd.f32 %v200, 1.0
    %v217 = vadd.f32 %v201, 1.0
    %v218 = vadd.f32 %v202, 1.0
    %v219 = vadd.f32 %v203, 1.0
    %v220 = vmul.f32 %v204, 0.5
    %v221 = vmul.f32 %v205, 0.5
    %v222 = vmul.f32 %v206, 0.5
    %v223 = vmul.f32 %v207, 0.5
    %v224 = vmul.f32 %v208, 0.5
    %v225 = vmul.f32 %v209, 0.5
    %v226 = vmul.f32 %v210, 0.5
    %v227 = vmul.f32 %v211, 0.5
    %v228 = vmul.f32 %v212, 0.5
    %v229 = vmul.f32 %v213, 0.5
    %v230 = vmul.f32 %v214, 0.5
    %v231 = vmul.f32 %v215, 0.5
    %v232 = vmul.f32 %v216, 0.5
    %v233 = vmul.f32 %v217, 0.5
    %v234 = vmul.f32 %v218, 0.5
    %v235 = vmul.f32 %v219, 0.5
    %vm236 = vcmp.ge.f32.partialorder %v124, 0.0
    %vm237 = vcmp.ge.f32.partialorder %v125, 0.0
    %vm238 = vcmp.ge.f32.partialorder %v126, 0.0
    %vm239 = vcmp.ge.f32.partialorder %v127, 0.0
    %vm240 = vcmp.ge.f32.partialorder %v128, 0.0
    %vm241 = vcmp.ge.f32.partialorder %v129, 0.0
    %vm242 = vcmp.ge.f32.partialorder %v130, 0.0
    %vm243 = vcmp.ge.f32.partialorder %v131, 0.0
    %vm244 = vcmp.ge.f32.partialorder %v132, 0.0
    %vm245 = vcmp.ge.f32.partialorder %v133, 0.0
    %vm246 = vcmp.ge.f32.partialorder %v134, 0.0
    %vm247 = vcmp.ge.f32.partialorder %v135, 0.0
    %vm248 = vcmp.ge.f32.partialorder %v136, 0.0
    %vm249 = vcmp.ge.f32.partialorder %v137, 0.0
    %vm250 = vcmp.ge.f32.partialorder %v138, 0.0
    %vm251 = vcmp.ge.f32.partialorder %v139, 0.0
    %v252 = vsub.f32 1.0, %v220
    %v253 = vsub.f32 1.0, %v221
    %v254 = vsub.f32 1.0, %v222
    %v255 = vsub.f32 1.0, %v223
    %v256 = vsub.f32 1.0, %v224
    %v257 = vsub.f32 1.0, %v225
    %v258 = vsub.f32 1.0, %v226
    %v259 = vsub.f32 1.0, %v227
    %v260 = vsub.f32 1.0, %v228
    %v261 = vsub.f32 1.0, %v229
    %v262 = vsub.f32 1.0, %v230
    %v263 = vsub.f32 1.0, %v231
    %v264 = vsub.f32 1.0, %v232
    %v265 = vsub.f32 1.0, %v233
    %v266 = vsub.f32 1.0, %v234
    %v267 = vsub.f32 1.0, %v235
    %v268 = vsel %vm236, %v220, %v252
    %v269 = vsel %vm237, %v221, %v253
    %v270 = vsel %vm238, %v222, %v254
    %v271 = vsel %vm239, %v223, %v255
    %v272 = vsel %vm240, %v224, %v256
    %v273 = vsel %vm241, %v225, %v257
    %v274 = vsel %vm242, %v226, %v258
    %v275 = vsel %vm243, %v227, %v259
    %v276 = vsel %vm244, %v228, %v260
    %v277 = vsel %vm245, %v229, %v261
    %v278 = vsel %vm246, %v230, %v262
    %v279 = vsel %vm247, %v231, %v263
    %v280 = vsel %vm248, %v232, %v264
    %v281 = vsel %vm249, %v233, %v265
    %v282 = vsel %vm250, %v234, %v266
    %v283 = vsel %vm251, %v235, %v267
    %v284 = vmax.f32 %v124, 0.0
    %v285 = vmax.f32 %v125, 0.0
    %v286 = vmax.f32 %v126, 0.0
    %v287 = vmax.f32 %v127, 0.0
    %v288 = vmax.f32 %v128, 0.0
    %v289 = vmax.f32 %v129, 0.0
    %v290 = vmax.f32 %v130, 0.0
    %v291 = vmax.f32 %v131, 0.0
    %v292 = vmax.f32 %v132, 0.0
    %v293 = vmax.f32 %v133, 0.0
    %v294 = vmax.f32 %v134, 0.0
    %v295 = vmax.f32 %v135, 0.0
    %v296 = vmax.f32 %v136, 0.0
    %v297 = vmax.f32 %v137, 0.0
    %v298 = vmax.f32 %v138, 0.0
    %v299 = vmax.f32 %v139, 0.0
    %v300 = vmul.f32 %v124, %v140
    %v301 = vmul.f32 %v125, %v141
    %v302 = vmul.f32 %v126, %v142
    %v303 = vmul.f32 %v127, %v143
    %v304 = vmul.f32 %v128, %v144
    %v305 = vmul.f32 %v129, %v145
    %v306 = vmul.f32 %v130, %v146
    %v307 = vmul.f32 %v131, %v147
    %v308 = vmul.f32 %v132, %v148
    %v309 = vmul.f32 %v133, %v149
    %v310 = vmul.f32 %v134, %v150
    %v311 = vmul.f32 %v135, %v151
    %v312 = vmul.f32 %v136, %v152
    %v313 = vmul.f32 %v137, %v153
    %v314 = vmul.f32 %v138, %v154
    %v315 = vmul.f32 %v139, %v155
    %v316 = vsub.f32 %v284, %v300
    %v317 = vsub.f32 %v285, %v301
    %v318 = vsub.f32 %v286, %v302
    %v319 = vsub.f32 %v287, %v303
    %v320 = vsub.f32 %v288, %v304
    %v321 = vsub.f32 %v289, %v305
    %v322 = vsub.f32 %v290, %v306
    %v323 = vsub.f32 %v291, %v307
    %v324 = vsub.f32 %v292, %v308
    %v325 = vsub.f32 %v293, %v309
    %v326 = vsub.f32 %v294, %v310
    %v327 = vsub.f32 %v295, %v311
    %v328 = vsub.f32 %v296, %v312
    %v329 = vsub.f32 %v297, %v313
    %v330 = vsub.f32 %v298, %v314
    %v331 = vsub.f32 %v299, %v315
    %v332 = vlog2.pop %v220
    %v333 = vmul.f32 %v332, 0.6931472
    %v334 = vlog2.pop %v221
    %v335 = vmul.f32 %v334, 0.6931472
    %v336 = vlog2.pop %v222
    %v337 = vmul.f32 %v336, 0.6931472
    %v338 = vlog2.pop %v223
    %v339 = vmul.f32 %v338, 0.6931472
    %v340 = vlog2.pop %v224
    %v341 = vmul.f32 %v340, 0.6931472
    %v342 = vlog2.pop %v225
    %v343 = vmul.f32 %v342, 0.6931472
    %v344 = vlog2.pop %v226
    %v345 = vmul.f32 %v344, 0.6931472
    %v346 = vlog2.pop %v227
    %v347 = vmul.f32 %v346, 0.6931472
    %v348 = vlog2.pop %v228
    %v349 = vmul.f32 %v348, 0.6931472
    %v350 = vlog2.pop %v229
    %v351 = vmul.f32 %v350, 0.6931472
    %v352 = vlog2.pop %v230
    %v353 = vmul.f32 %v352, 0.6931472
    %v354 = vlog2.pop %v231
    %v355 = vmul.f32 %v354, 0.6931472
    %v356 = vlog2.pop %v232
    %v357 = vmul.f32 %v356, 0.6931472
    %v358 = vlog2.pop %v233
    %v359 = vmul.f32 %v358, 0.6931472
    %v360 = vlog2.pop %v234
    %v361 = vmul.f32 %v360, 0.6931472
    %v362 = vlog2.pop %v235
    %v363 = vmul.f32 %v362, 0.6931472
    %v364 = vsub.f32 %v316, %v333
    %v365 = vsub.f32 %v317, %v335
    %v366 = vsub.f32 %v318, %v337
    %v367 = vsub.f32 %v319, %v339
    %v368 = vsub.f32 %v320, %v341
    %v369 = vsub.f32 %v321, %v343
    %v370 = vsub.f32 %v322, %v345
    %v371 = vsub.f32 %v323, %v347
    %v372 = vsub.f32 %v324, %v349
    %v373 = vsub.f32 %v325, %v351
    %v374 = vsub.f32 %v326, %v353
    %v375 = vsub.f32 %v327, %v355
    %v376 = vsub.f32 %v328, %v357
    %v377 = vsub.f32 %v329, %v359
    %v378 = vsub.f32 %v330, %v361
    %v379 = vsub.f32 %v331, %v363
    %v380 = vld [vmem:[#allocation7] sm:$0xff]
    %v381 = vld [vmem:[#allocation7 + $0x8] sm:$0xff]
    %v382 = vld [vmem:[#allocation7 + $0x10] sm:$0xff]
    %v383 = vld [vmem:[#allocation7 + $0x18] sm:$0xff]
    %v384 = vld [vmem:[#allocation7 + $0x20] sm:$0xff]
    %v385 = vld [vmem:[#allocation7 + $0x28] sm:$0xff]
    %v386 = vld [vmem:[#allocation7 + $0x30] sm:$0xff]
    %v387 = vld [vmem:[#allocation7 + $0x38] sm:$0xff]
    %v388 = vld [vmem:[#allocation7 + $0x40] sm:$0xff]
    %v389 = vld [vmem:[#allocation7 + $0x48] sm:$0xff]
    %v390 = vld [vmem:[#allocation7 + $0x50] sm:$0xff]
    %v391 = vld [vmem:[#allocation7 + $0x58] sm:$0xff]
    %v392 = vld [vmem:[#allocation7 + $0x60] sm:$0xff]
    %v393 = vld [vmem:[#allocation7 + $0x68] sm:$0xff]
    %v394 = vld [vmem:[#allocation7 + $0x70] sm:$0xff]
    %v395 = vld [vmem:[#allocation7 + $0x78] sm:$0xff]
    %v396 = vmul.f32 %v268, %v140
    %v397 = vmul.f32 %v269, %v141
    %v398 = vmul.f32 %v270, %v142
    %v399 = vmul.f32 %v271, %v143
    %v400 = vmul.f32 %v272, %v144
    %v401 = vmul.f32 %v273, %v145
    %v402 = vmul.f32 %v274, %v146
    %v403 = vmul.f32 %v275, %v147
    %v404 = vmul.f32 %v276, %v148
    %v405 = vmul.f32 %v277, %v149
    %v406 = vmul.f32 %v278, %v150
    %v407 = vmul.f32 %v279, %v151
    %v408 = vmul.f32 %v280, %v152
    %v409 = vmul.f32 %v281, %v153
    %v410 = vmul.f32 %v282, %v154
    %v411 = vmul.f32 %v283, %v155
    %v412 = vadd.f32 %v380, %v396
    %v413 = vadd.f32 %v381, %v397
    %v414 = vadd.f32 %v382, %v398
    %v415 = vadd.f32 %v383, %v399
    %v416 = vadd.f32 %v384, %v400
    %v417 = vadd.f32 %v385, %v401
    %v418 = vadd.f32 %v386, %v402
    %v419 = vadd.f32 %v387, %v403
    %v420 = vadd.f32 %v388, %v404
    %v421 = vadd.f32 %v389, %v405
    %v422 = vadd.f32 %v390, %v406
    %v423 = vadd.f32 %v391, %v407
    %v424 = vadd.f32 %v392, %v408
    %v425 = vadd.f32 %v393, %v409
    %v426 = vadd.f32 %v394, %v410
    %v427 = vadd.f32 %v395, %v411
    %428 = vst [vmem:[#allocation7] sm:$0xff] %v412
    %429 = vst [vmem:[#allocation7 + $0x8] sm:$0xff] %v413
    %430 = vst [vmem:[#allocation7 + $0x10] sm:$0xff] %v414
    %431 = vst [vmem:[#allocation7 + $0x18] sm:$0xff] %v415
    %432 = vst [vmem:[#allocation7 + $0x20] sm:$0xff] %v416
    %433 = vst [vmem:[#allocation7 + $0x28] sm:$0xff] %v417
    %434 = vst [vmem:[#allocation7 + $0x30] sm:$0xff] %v418
    %435 = vst [vmem:[#allocation7 + $0x38] sm:$0xff] %v419
    %436 = vst [vmem:[#allocation7 + $0x40] sm:$0xff] %v420
    %437 = vst [vmem:[#allocation7 + $0x48] sm:$0xff] %v421
    %438 = vst [vmem:[#allocation7 + $0x50] sm:$0xff] %v422
    %439 = vst [vmem:[#allocation7 + $0x58] sm:$0xff] %v423
    %440 = vst [vmem:[#allocation7 + $0x60] sm:$0xff] %v424
    %441 = vst [vmem:[#allocation7 + $0x68] sm:$0xff] %v425
    %442 = vst [vmem:[#allocation7 + $0x70] sm:$0xff] %v426
    %443 = vst [vmem:[#allocation7 + $0x78] sm:$0xff] %v427
    %v444 = vld [vmem:[#allocation7 + $0x80] sm:$0xff]
    %v445 = vld [vmem:[#allocation7 + $0x88] sm:$0xff]
    %v446 = vld [vmem:[#allocation7 + $0x90] sm:$0xff]
    %v447 = vld [vmem:[#allocation7 + $0x98] sm:$0xff]
    %v448 = vld [vmem:[#allocation7 + $0xa0] sm:$0xff]
    %v449 = vld [vmem:[#allocation7 + $0xa8] sm:$0xff]
    %v450 = vld [vmem:[#allocation7 + $0xb0] sm:$0xff]
    %v451 = vld [vmem:[#allocation7 + $0xb8] sm:$0xff]
    %v452 = vld [vmem:[#allocation7 + $0xc0] sm:$0xff]
    %v453 = vld [vmem:[#allocation7 + $0xc8] sm:$0xff]
    %v454 = vld [vmem:[#allocation7 + $0xd0] sm:$0xff]
    %v455 = vld [vmem:[#allocation7 + $0xd8] sm:$0xff]
    %v456 = vld [vmem:[#allocation7 + $0xe0] sm:$0xff]
    %v457 = vld [vmem:[#allocation7 + $0xe8] sm:$0xff]
    %v458 = vld [vmem:[#allocation7 + $0xf0] sm:$0xff]
    %v459 = vld [vmem:[#allocation7 + $0xf8] sm:$0xff]
    %v460 = vadd.f32 %v444, %v268
    %v461 = vadd.f32 %v445, %v269
    %v462 = vadd.f32 %v446, %v270
    %v463 = vadd.f32 %v447, %v271
    %v464 = vadd.f32 %v448, %v272
    %v465 = vadd.f32 %v449, %v273
    %v466 = vadd.f32 %v450, %v274
    %v467 = vadd.f32 %v451, %v275
    %v468 = vadd.f32 %v452, %v276
    %v469 = vadd.f32 %v453, %v277
    %v470 = vadd.f32 %v454, %v278
    %v471 = vadd.f32 %v455, %v279
    %v472 = vadd.f32 %v456, %v280
    %v473 = vadd.f32 %v457, %v281
    %v474 = vadd.f32 %v458, %v282
    %v475 = vadd.f32 %v459, %v283
    %476 = vst [vmem:[#allocation7 + $0x80] sm:$0xff] %v460
    %477 = vst [vmem:[#allocation7 + $0x88] sm:$0xff] %v461
    %478 = vst [vmem:[#allocation7 + $0x90] sm:$0xff] %v462
    %479 = vst [vmem:[#allocation7 + $0x98] sm:$0xff] %v463
    %480 = vst [vmem:[#allocation7 + $0xa0] sm:$0xff] %v464
    %481 = vst [vmem:[#allocation7 + $0xa8] sm:$0xff] %v465
    %482 = vst [vmem:[#allocation7 + $0xb0] sm:$0xff] %v466
    %483 = vst [vmem:[#allocation7 + $0xb8] sm:$0xff] %v467
    %484 = vst [vmem:[#allocation7 + $0xc0] sm:$0xff] %v468
    %485 = vst [vmem:[#allocation7 + $0xc8] sm:$0xff] %v469
    %486 = vst [vmem:[#allocation7 + $0xd0] sm:$0xff] %v470
    %487 = vst [vmem:[#allocation7 + $0xd8] sm:$0xff] %v471
    %488 = vst [vmem:[#allocation7 + $0xe0] sm:$0xff] %v472
    %489 = vst [vmem:[#allocation7 + $0xe8] sm:$0xff] %v473
    %490 = vst [vmem:[#allocation7 + $0xf0] sm:$0xff] %v474
    %491 = vst [vmem:[#allocation7 + $0xf8] sm:$0xff] %v475
    %v492 = vld [vmem:[#allocation7 + $0x100] sm:$0xff]
    %v493 = vld [vmem:[#allocation7 + $0x108] sm:$0xff]
    %v494 = vld [vmem:[#allocation7 + $0x110] sm:$0xff]
    %v495 = vld [vmem:[#allocation7 + $0x118] sm:$0xff]
    %v496 = vld [vmem:[#allocation7 + $0x120] sm:$0xff]
    %v497 = vld [vmem:[#allocation7 + $0x128] sm:$0xff]
    %v498 = vld [vmem:[#allocation7 + $0x130] sm:$0xff]
    %v499 = vld [vmem:[#allocation7 + $0x138] sm:$0xff]
    %v500 = vld [vmem:[#allocation7 + $0x140] sm:$0xff]
    %v501 = vld [vmem:[#allocation7 + $0x148] sm:$0xff]
    %v502 = vld [vmem:[#allocation7 + $0x150] sm:$0xff]
    %v503 = vld [vmem:[#allocation7 + $0x158] sm:$0xff]
    %v504 = vld [vmem:[#allocation7 + $0x160] sm:$0xff]
    %v505 = vld [vmem:[#allocation7 + $0x168] sm:$0xff]
    %v506 = vld [vmem:[#allocation7 + $0x170] sm:$0xff]
    %v507 = vld [vmem:[#allocation7 + $0x178] sm:$0xff]
    %v508 = vadd.f32 %v492, %v140
    %v509 = vadd.f32 %v493, %v141
    %v510 = vadd.f32 %v494, %v142
    %v511 = vadd.f32 %v495, %v143
    %v512 = vadd.f32 %v496, %v144
    %v513 = vadd.f32 %v497, %v145
    %v514 = vadd.f32 %v498, %v146
    %v515 = vadd.f32 %v499, %v147
    %v516 = vadd.f32 %v500, %v148
    %v517 = vadd.f32 %v501, %v149
    %v518 = vadd.f32 %v502, %v150
    %v519 = vadd.f32 %v503, %v151
    %v520 = vadd.f32 %v504, %v152
    %v521 = vadd.f32 %v505, %v153
    %v522 = vadd.f32 %v506, %v154
    %v523 = vadd.f32 %v507, %v155
    %524 = vst [vmem:[#allocation7 + $0x100] sm:$0xff] %v508
    %525 = vst [vmem:[#allocation7 + $0x108] sm:$0xff] %v509
    %526 = vst [vmem:[#allocation7 + $0x110] sm:$0xff] %v510
    %527 = vst [vmem:[#allocation7 + $0x118] sm:$0xff] %v511
    %528 = vst [vmem:[#allocation7 + $0x120] sm:$0xff] %v512
    %529 = vst [vmem:[#allocation7 + $0x128] sm:$0xff] %v513
    %530 = vst [vmem:[#allocation7 + $0x130] sm:$0xff] %v514
    %531 = vst [vmem:[#allocation7 + $0x138] sm:$0xff] %v515
    %532 = vst [vmem:[#allocation7 + $0x140] sm:$0xff] %v516
    %533 = vst [vmem:[#allocation7 + $0x148] sm:$0xff] %v517
    %534 = vst [vmem:[#allocation7 + $0x150] sm:$0xff] %v518
    %535 = vst [vmem:[#allocation7 + $0x158] sm:$0xff] %v519
    %536 = vst [vmem:[#allocation7 + $0x160] sm:$0xff] %v520
    %537 = vst [vmem:[#allocation7 + $0x168] sm:$0xff] %v521
    %538 = vst [vmem:[#allocation7 + $0x170] sm:$0xff] %v522
    %539 = vst [vmem:[#allocation7 + $0x178] sm:$0xff] %v523
    %v540 = vld [vmem:[#allocation7 + $0x180] sm:$0xff]
    %v541 = vld [vmem:[#allocation7 + $0x188] sm:$0xff]
    %v542 = vld [vmem:[#allocation7 + $0x190] sm:$0xff]
    %v543 = vld [vmem:[#allocation7 + $0x198] sm:$0xff]
    %v544 = vld [vmem:[#allocation7 + $0x1a0] sm:$0xff]
    %v545 = vld [vmem:[#allocation7 + $0x1a8] sm:$0xff]
    %v546 = vld [vmem:[#allocation7 + $0x1b0] sm:$0xff]
    %v547 = vld [vmem:[#allocation7 + $0x1b8] sm:$0xff]
    %v548 = vld [vmem:[#allocation7 + $0x1c0] sm:$0xff]
    %v549 = vld [vmem:[#allocation7 + $0x1c8] sm:$0xff]
    %v550 = vld [vmem:[#allocation7 + $0x1d0] sm:$0xff]
    %v551 = vld [vmem:[#allocation7 + $0x1d8] sm:$0xff]
    %v552 = vld [vmem:[#allocation7 + $0x1e0] sm:$0xff]
    %v553 = vld [vmem:[#allocation7 + $0x1e8] sm:$0xff]
    %v554 = vld [vmem:[#allocation7 + $0x1f0] sm:$0xff]
    %v555 = vld [vmem:[#allocation7 + $0x1f8] sm:$0xff]
    %v556 = vadd.f32 %v540, %v364
    %v557 = vadd.f32 %v541, %v365
    %v558 = vadd.f32 %v542, %v366
    %v559 = vadd.f32 %v543, %v367
    %v560 = vadd.f32 %v544, %v368
    %v561 = vadd.f32 %v545, %v369
    %v562 = vadd.f32 %v546, %v370
    %v563 = vadd.f32 %v547, %v371
    %v564 = vadd.f32 %v548, %v372
    %v565 = vadd.f32 %v549, %v373
    %v566 = vadd.f32 %v550, %v374
    %v567 = vadd.f32 %v551, %v375
    %v568 = vadd.f32 %v552, %v376
    %v569 = vadd.f32 %v553, %v377
    %v570 = vadd.f32 %v554, %v378
    %v571 = vadd.f32 %v555, %v379
    %572 = vst [vmem:[#allocation7 + $0x180] sm:$0xff] %v556
    %573 = vst [vmem:[#allocation7 + $0x188] sm:$0xff] %v557
    %574 = vst [vmem:[#allocation7 + $0x190] sm:$0xff] %v558
    %575 = vst [vmem:[#allocation7 + $0x198] sm:$0xff] %v559
    %576 = vst [vmem:[#allocation7 + $0x1a0] sm:$0xff] %v560
    %577 = vst [vmem:[#allocation7 + $0x1a8] sm:$0xff] %v561
    %578 = vst [vmem:[#allocation7 + $0x1b0] sm:$0xff] %v562
    %579 = vst [vmem:[#allocation7 + $0x1b8] sm:$0xff] %v563
    %580 = vst [vmem:[#allocation7 + $0x1c0] sm:$0xff] %v564
    %581 = vst [vmem:[#allocation7 + $0x1c8] sm:$0xff] %v565
    %582 = vst [vmem:[#allocation7 + $0x1d0] sm:$0xff] %v566
    %583 = vst [vmem:[#allocation7 + $0x1d8] sm:$0xff] %v567
    %584 = vst [vmem:[#allocation7 + $0x1e0] sm:$0xff] %v568
    %585 = vst [vmem:[#allocation7 + $0x1e8] sm:$0xff] %v569
    %586 = vst [vmem:[#allocation7 + $0x1f0] sm:$0xff] %v570
    %587 = vst [vmem:[#allocation7 + $0x1f8] sm:$0xff] %v571
    // Predicated region
    $region22: #{dc_and_bce_loss.1} parent=1 // pred_check
      _
    $region23: #{dc_and_bce_loss.1} parent=1 // pred_check_branch
      %589 = sbr.rel (0) target = $region25
    $region24: #{dc_and_bce_loss.1} parent=1 // pred_region
      %s591 = ssub.s32 8192, 8192
      %592 = vsyncadd [#allocation4], %s591
      %s594 = sshll.u32 [#allocation7], 4
      %s595 = int_to_ptr.vmem [resolvable:$true] %s594
      %597 = dma.vmem_to_hbm [thread:$0]  %s595, 8192, %s2, [#allocation4]
    $region25: #{dc_and_bce_loss.1} parent=1 // pred_fallthru
      _
    // Predicated region
    $region26: #{dc_and_bce_loss.1} parent=1 // pred_check
      _
    $region27: #{dc_and_bce_loss.1} parent=1 // pred_check_branch
      %599 = sbr.rel (0) target = $region29
    $region28: #{dc_and_bce_loss.1} parent=1 // pred_region
      %600 = dma.done [#allocation4], 8192
    $region29: #{dc_and_bce_loss.1} parent=1 // pred_fallthru
      _
    %601 = vsyncpa [#allocation3], 1
    %602 = vsyncpa [#allocation6], 1
    %603 = vsyncpa [#allocation4], 1

</llo_original>
